<compile_context>
chip_gen: v7x
topology: tpu7x:2x2x1
jax: 0.10.0
libtpu: 0.0.40
codegen_flags: <defaults>
</compile_context>

<pallas_src>
import jax
import jax.numpy as jnp
from jax.experimental import pallas as pl
from jax.experimental.pallas import tpu as pltpu

LN_EPS = 1e-5  # PyTorch nn.LayerNorm default


def edge_mlp_kernel(src_ref, dst_ref, edge_ref,
                    w1s_ref, w1d_ref, w1e_ref, b1_ref,
                    g_ref, beta_ref, w2_ref, b2_ref, o_ref):
    # --- Linear 1: split-K matmuls replace cat([src, dest, edge]) @ W1 -------
    # Operands may be bf16; accumulation is f32 on the MXU.
    h = jnp.dot(src_ref[...], w1s_ref[...], preferred_element_type=jnp.float32)
    h = h + jnp.dot(dst_ref[...], w1d_ref[...], preferred_element_type=jnp.float32)
    h = h + jnp.dot(edge_ref[...], w1e_ref[...], preferred_element_type=jnp.float32)
    h = h + b1_ref[...]                                   # (tm, hid) f32

    # --- ReLU (VPU, f32) -----------------------------------------------------
    h = jnp.maximum(h, 0.0)

    # --- LayerNorm over the hidden (lane) axis, per row (f32) ----------------
    mean = jnp.mean(h, axis=-1, keepdims=True)
    diff = h - mean
    var = jnp.mean(diff * diff, axis=-1, keepdims=True)
    # gamma folded into the rsqrt scale; rsqrt goes to the EUP slot.
    scale = g_ref[...] * jax.lax.rsqrt(var + LN_EPS)      # (tm, hid)
    hn = diff * scale + beta_ref[...]

    # --- Linear 2 (MXU) + bias -----------------------------------------------
    y = jnp.dot(hn.astype(w2_ref.dtype), w2_ref[...],
                preferred_element_type=jnp.float32) + b2_ref[...]
    o_ref[...] = y.astype(o_ref.dtype)


def _choose_row_tile(E):
    """Biggest reasonable row tile; keep >= 2 grid steps for v7x megacore."""
    tm = min(1024, max(8, pl.cdiv(E, 2)))
    return pl.cdiv(tm, 8) * 8


def small_edge_model(src, dest, edge_attr, params, *, tm=None, use_bf16_mxu=True):
    w1, b1, g, beta, w2, b2 = params
    E = src.shape[0]
    d_s, d_d, d_e = src.shape[1], dest.shape[1], edge_attr.shape[1]
    in_dim = d_s + d_d + d_e
    assert w1.shape[0] == in_dim, "W1 rows must equal concat feature width"
    hid = w1.shape[1]
    out_dim = w2.shape[1]

    mxu_dtype = jnp.bfloat16 if use_bf16_mxu else jnp.float32
    msize = jnp.dtype(mxu_dtype).itemsize

    if tm is None:
        tm = _choose_row_tile(E)
    E_pad = pl.cdiv(E, tm) * tm

    def prep_rows(a):
        a = a.astype(mxu_dtype)
        if E_pad != E:
            a = jnp.pad(a, ((0, E_pad - E), (0, 0)))
        return a

    src_p, dst_p, edge_p = prep_rows(src), prep_rows(dest), prep_rows(edge_attr)

    # Split W1 into the three K-blocks matching [src | dest | edge_attr].
    w1m = w1.astype(mxu_dtype)
    w1s, w1d, w1e = w1m[:d_s], w1m[d_s:d_s + d_d], w1m[d_s + d_d:]
    w2m = w2.astype(mxu_dtype)
    b1f = b1.astype(jnp.float32).reshape(1, hid)
    gf = g.astype(jnp.float32).reshape(1, hid)
    betaf = beta.astype(jnp.float32).reshape(1, hid)
    b2f = b2.astype(jnp.float32).reshape(1, out_dim)

    grid = (E_pad // tm,)
    resident = lambda shape: pl.BlockSpec(shape, lambda i: (0, 0))

    cost = pl.CostEstimate(
        flops=2 * E_pad * (in_dim * hid + hid * out_dim),
        transcendentals=E_pad,  # one rsqrt per row
        bytes_accessed=(E_pad * in_dim * msize                # activations in
                        + (in_dim * hid + hid * out_dim) * msize  # weights
                        + (3 * hid + out_dim) * 4              # biases / LN
                        + E_pad * out_dim * 4),                # output
    )

    out = pl.pallas_call(
        edge_mlp_kernel,
        out_shape=jax.ShapeDtypeStruct((E_pad, out_dim), jnp.float32),
        grid_spec=pltpu.PrefetchScalarGridSpec(
            num_scalar_prefetch=0,
            grid=grid,
            in_specs=[
                pl.BlockSpec((tm, d_s), lambda i: (i, 0)),   # src rows tiled
                pl.BlockSpec((tm, d_d), lambda i: (i, 0)),   # dest rows tiled
                pl.BlockSpec((tm, d_e), lambda i: (i, 0)),   # edge rows tiled
                resident((d_s, hid)),                        # W1[:d_s]
                resident((d_d, hid)),                        # W1[d_s:d_s+d_d]
                resident((d_e, hid)),                        # W1[d_s+d_d:]
                resident((1, hid)),                          # b1
                resident((1, hid)),                          # gamma
                resident((1, hid)),                          # beta
                resident((hid, out_dim)),                    # W2
                resident((1, out_dim)),                      # b2
            ],
            out_specs=pl.BlockSpec((tm, out_dim), lambda i: (i, 0)),
        ),
        compiler_params=pltpu.CompilerParams(
            dimension_semantics=("parallel",)),
        cost_estimate=cost,
    )(src_p, dst_p, edge_p, w1s, w1d, w1e, b1f, gf, betaf, w2m, b2f)

    return out[:E] if E_pad != E else out


def make_params(key, in_dim, hid_dim, out_dim):
    """Deterministic synthetic init mirroring the nn.Sequential shapes."""
    k1, k2, k3, k4 = jax.random.split(key, 4)
    w1 = jax.random.normal(k1, (in_dim, hid_dim), jnp.float32) * (1.0 / jnp.sqrt(in_dim))
    b1 = jax.random.normal(k2, (1, hid_dim), jnp.float32) * 0.01
    g = jnp.ones((1, hid_dim), jnp.float32)         # LayerNorm weight
    beta = jnp.zeros((1, hid_dim), jnp.float32)     # LayerNorm bias
    w2 = jax.random.normal(k3, (hid_dim, out_dim), jnp.float32) * (1.0 / jnp.sqrt(hid_dim))
    b2 = jax.random.normal(k4, (1, out_dim), jnp.float32) * 0.01
    return (w1, b1, g, beta, w2, b2)


def reference_f32(src, dest, edge_attr, params):
    """Plain-JAX f32 reference of the PyTorch forward pass."""
    w1, b1, g, beta, w2, b2 = params
    x = jnp.concatenate([src, dest, edge_attr], axis=1)
    h = jnp.maximum(x @ w1 + b1, 0.0)
    mean = jnp.mean(h, axis=-1, keepdims=True)
    var = jnp.mean((h - mean) ** 2, axis=-1, keepdims=True)
    hn = (h - mean) / jnp.sqrt(var + LN_EPS) * g + beta
    return hn @ w2 + b2


def reference_matched(src, dest, edge_attr, params, use_bf16_mxu=True):
    """Reference that mirrors the kernel's numerics (bf16 MXU operands, f32 acc)."""
    w1, b1, g, beta, w2, b2 = params
    mxu_dtype = jnp.bfloat16 if use_bf16_mxu else jnp.float32
    d_s, d_d = src.shape[1], dest.shape[1]
    s, d, e = (a.astype(mxu_dtype) for a in (src, dest, edge_attr))
    w1m, w2m = w1.astype(mxu_dtype), w2.astype(mxu_dtype)
    h = (jnp.dot(s, w1m[:d_s], preferred_element_type=jnp.float32)
         + jnp.dot(d, w1m[d_s:d_s + d_d], preferred_element_type=jnp.float32)
         + jnp.dot(e, w1m[d_s + d_d:], preferred_element_type=jnp.float32)
         + b1)
    h = jnp.maximum(h, 0.0)
    mean = jnp.mean(h, axis=-1, keepdims=True)
    diff = h - mean
    var = jnp.mean(diff * diff, axis=-1, keepdims=True)
    hn = diff * (g * jax.lax.rsqrt(var + LN_EPS)) + beta
    return jnp.dot(hn.astype(mxu_dtype), w2m, preferred_element_type=jnp.float32) + b2


if __name__ == "__main__":
    # Small, forward-consistent shapes:
    #   E edges; src/dest node features of dim 8 each; edge features of dim 4
    #   -> in_dim = 20, hid_dim = 32, out_dim = 16
    E, SRC_D, DST_D, EDGE_D = 128, 8, 8, 4
    IN_DIM, HID_DIM, OUT_DIM = SRC_D + DST_D + EDGE_D, 32, 16

    key = jax.random.PRNGKey(0)
    ks, kd, ke, kp = jax.random.split(key, 4)
    src = jax.random.normal(ks, (E, SRC_D), jnp.float32)
    dest = jax.random.normal(kd, (E, DST_D), jnp.float32)
    edge_attr = jax.random.normal(ke, (E, EDGE_D), jnp.float32)
    params = make_params(kp, IN_DIM, HID_DIM, OUT_DIM)

    out = small_edge_model(src, dest, edge_attr, params)
    out = jax.block_until_ready(out)
    assert out.shape == (E, OUT_DIM)

    # Tight check against a reference that mirrors the kernel's numerics.
    ref_m = reference_matched(src, dest, edge_attr, params)
    assert jnp.allclose(out, ref_m, atol=2e-3, rtol=2e-3)

    # Loose sanity check against the pure-f32 PyTorch-equivalent forward
    # (bf16 MXU operands introduce ~1e-2-scale differences).
    ref = reference_f32(src, dest, edge_attr, params)
    assert jnp.allclose(out, ref, atol=2e-1, rtol=2e-1)

    print("KERNEL_OK")
</pallas_src>

<mosaic_0001>
module attributes {stable_mosaic.version = 11 : i64} {
  func.func @edge_mlp_kernel(%arg0: i32, %arg1: memref<64x8xbf16, #tpu.memory_space<vmem>>, %arg2: memref<64x8xbf16, #tpu.memory_space<vmem>>, %arg3: memref<64x4xbf16, #tpu.memory_space<vmem>>, %arg4: memref<8x32xbf16, #tpu.memory_space<vmem>>, %arg5: memref<8x32xbf16, #tpu.memory_space<vmem>>, %arg6: memref<4x32xbf16, #tpu.memory_space<vmem>>, %arg7: memref<1x32xf32, #tpu.memory_space<vmem>>, %arg8: memref<1x32xf32, #tpu.memory_space<vmem>>, %arg9: memref<1x32xf32, #tpu.memory_space<vmem>>, %arg10: memref<32x16xbf16, #tpu.memory_space<vmem>>, %arg11: memref<1x16xf32, #tpu.memory_space<vmem>>, %arg12: memref<64x16xf32, #tpu.memory_space<vmem>>) attributes {dimension_semantics = [#tpu.dimension_semantics<parallel>], iteration_bounds = array<i64: 2>, scalar_prefetch = 0 : i64, scratch_operands = 0 : i64, tpu.core_type = #tpu.core_type<tc>, window_params = [{transform_indices = @transform_0, window_bounds = array<i64: 64, 8>}, {transform_indices = @transform_1, window_bounds = array<i64: 64, 8>}, {transform_indices = @transform_2, window_bounds = array<i64: 64, 4>}, {pipeline_mode = #tpu.pipeline_mode<synchronous>, transform_indices = @transform_3, window_bounds = array<i64: 8, 32>}, {pipeline_mode = #tpu.pipeline_mode<synchronous>, transform_indices = @transform_4, window_bounds = array<i64: 8, 32>}, {pipeline_mode = #tpu.pipeline_mode<synchronous>, transform_indices = @transform_5, window_bounds = array<i64: 4, 32>}, {pipeline_mode = #tpu.pipeline_mode<synchronous>, transform_indices = @transform_6, window_bounds = array<i64: 1, 32>}, {pipeline_mode = #tpu.pipeline_mode<synchronous>, transform_indices = @transform_7, window_bounds = array<i64: 1, 32>}, {pipeline_mode = #tpu.pipeline_mode<synchronous>, transform_indices = @transform_8, window_bounds = array<i64: 1, 32>}, {pipeline_mode = #tpu.pipeline_mode<synchronous>, transform_indices = @transform_9, window_bounds = array<i64: 32, 16>}, {pipeline_mode = #tpu.pipeline_mode<synchronous>, transform_indices = @transform_10, window_bounds = array<i64: 1, 16>}, {transform_indices = @transform_11, window_bounds = array<i64: 64, 16>}]} {
    %c0 = arith.constant 0 : index
    %c0_0 = arith.constant 0 : index
    %0 = vector.load %arg1[%c0, %c0_0] : memref<64x8xbf16, #tpu.memory_space<vmem>>, vector<64x8xbf16>
    %c0_1 = arith.constant 0 : index
    %c0_2 = arith.constant 0 : index
    %1 = vector.load %arg4[%c0_1, %c0_2] : memref<8x32xbf16, #tpu.memory_space<vmem>>, vector<8x32xbf16>
    %cst = arith.constant dense<0.000000e+00> : vector<64x32xf32>
    %2 = tpu.matmul %0, %1, %cst {dimension_numbers = #tpu.dot_dimension_numbers<[1], [0], [0], [1], [0, 0, 1, 1], [], []>} : vector<64x8xbf16>, vector<8x32xbf16>, vector<64x32xf32> -> vector<64x32xf32>
    %c0_3 = arith.constant 0 : index
    %c0_4 = arith.constant 0 : index
    %3 = vector.load %arg2[%c0_3, %c0_4] : memref<64x8xbf16, #tpu.memory_space<vmem>>, vector<64x8xbf16>
    %c0_5 = arith.constant 0 : index
    %c0_6 = arith.constant 0 : index
    %4 = vector.load %arg5[%c0_5, %c0_6] : memref<8x32xbf16, #tpu.memory_space<vmem>>, vector<8x32xbf16>
    %cst_7 = arith.constant dense<0.000000e+00> : vector<64x32xf32>
    %5 = tpu.matmul %3, %4, %cst_7 {dimension_numbers = #tpu.dot_dimension_numbers<[1], [0], [0], [1], [0, 0, 1, 1], [], []>} : vector<64x8xbf16>, vector<8x32xbf16>, vector<64x32xf32> -> vector<64x32xf32>
    %6 = arith.addf %2, %5 : vector<64x32xf32>
    %c0_8 = arith.constant 0 : index
    %c0_9 = arith.constant 0 : index
    %7 = vector.load %arg3[%c0_8, %c0_9] : memref<64x4xbf16, #tpu.memory_space<vmem>>, vector<64x4xbf16>
    %c0_10 = arith.constant 0 : index
    %c0_11 = arith.constant 0 : index
    %8 = vector.load %arg6[%c0_10, %c0_11] : memref<4x32xbf16, #tpu.memory_space<vmem>>, vector<4x32xbf16>
    %cst_12 = arith.constant dense<0.000000e+00> : vector<64x32xf32>
    %9 = tpu.matmul %7, %8, %cst_12 {dimension_numbers = #tpu.dot_dimension_numbers<[1], [0], [0], [1], [0, 0, 1, 1], [], []>} : vector<64x4xbf16>, vector<4x32xbf16>, vector<64x32xf32> -> vector<64x32xf32>
    %10 = arith.addf %6, %9 : vector<64x32xf32>
    %c0_13 = arith.constant 0 : index
    %c0_14 = arith.constant 0 : index
    %11 = vector.load %arg7[%c0_13, %c0_14] : memref<1x32xf32, #tpu.memory_space<vmem>>, vector<1x32xf32>
    %12 = vector.broadcast %11 : vector<1x32xf32> to vector<64x32xf32>
    %13 = arith.addf %10, %12 : vector<64x32xf32>
    %cst_15 = arith.constant 0.000000e+00 : f32
    %14 = vector.broadcast %cst_15 : f32 to vector<64x32xf32>
    %15 = arith.maximumf %13, %14 : vector<64x32xf32>
    %cst_16 = arith.constant dense<0.000000e+00> : vector<64xf32>
    %16 = vector.multi_reduction <add>, %15, %cst_16 [1] : vector<64x32xf32> to vector<64xf32>
    %17 = vector.shape_cast %16 : vector<64xf32> to vector<64x1xf32>
    %cst_17 = arith.constant 3.200000e+01 : f32
    %18 = vector.broadcast %cst_17 : f32 to vector<64x1xf32>
    %19 = arith.divf %17, %18 : vector<64x1xf32>
    %20 = vector.broadcast %19 : vector<64x1xf32> to vector<64x32xf32>
    %21 = arith.subf %15, %20 : vector<64x32xf32>
    %22 = arith.mulf %21, %21 : vector<64x32xf32>
    %cst_18 = arith.constant dense<0.000000e+00> : vector<64xf32>
    %23 = vector.multi_reduction <add>, %22, %cst_18 [1] : vector<64x32xf32> to vector<64xf32>
    %24 = vector.shape_cast %23 : vector<64xf32> to vector<64x1xf32>
    %cst_19 = arith.constant 3.200000e+01 : f32
    %25 = vector.broadcast %cst_19 : f32 to vector<64x1xf32>
    %26 = arith.divf %24, %25 : vector<64x1xf32>
    %c0_20 = arith.constant 0 : index
    %c0_21 = arith.constant 0 : index
    %27 = vector.load %arg8[%c0_20, %c0_21] : memref<1x32xf32, #tpu.memory_space<vmem>>, vector<1x32xf32>
    %cst_22 = arith.constant 9.99999974E-6 : f32
    %28 = vector.broadcast %cst_22 : f32 to vector<64x1xf32>
    %29 = arith.addf %26, %28 : vector<64x1xf32>
    %30 = math.rsqrt %29 : vector<64x1xf32>
    %31 = vector.broadcast %27 : vector<1x32xf32> to vector<64x32xf32>
    %32 = vector.broadcast %30 : vector<64x1xf32> to vector<64x32xf32>
    %33 = arith.mulf %31, %32 : vector<64x32xf32>
    %34 = arith.mulf %21, %33 : vector<64x32xf32>
    %c0_23 = arith.constant 0 : index
    %c0_24 = arith.constant 0 : index
    %35 = vector.load %arg9[%c0_23, %c0_24] : memref<1x32xf32, #tpu.memory_space<vmem>>, vector<1x32xf32>
    %36 = vector.broadcast %35 : vector<1x32xf32> to vector<64x32xf32>
    %37 = arith.addf %34, %36 : vector<64x32xf32>
    %38 = arith.truncf %37 : vector<64x32xf32> to vector<64x32xbf16>
    %c0_25 = arith.constant 0 : index
    %c0_26 = arith.constant 0 : index
    %39 = vector.load %arg10[%c0_25, %c0_26] : memref<32x16xbf16, #tpu.memory_space<vmem>>, vector<32x16xbf16>
    %cst_27 = arith.constant dense<0.000000e+00> : vector<64x16xf32>
    %40 = tpu.matmul %38, %39, %cst_27 {dimension_numbers = #tpu.dot_dimension_numbers<[1], [0], [0], [1], [0, 0, 1, 1], [], []>} : vector<64x32xbf16>, vector<32x16xbf16>, vector<64x16xf32> -> vector<64x16xf32>
    %c0_28 = arith.constant 0 : index
    %c0_29 = arith.constant 0 : index
    %41 = vector.load %arg11[%c0_28, %c0_29] : memref<1x16xf32, #tpu.memory_space<vmem>>, vector<1x16xf32>
    %42 = vector.broadcast %41 : vector<1x16xf32> to vector<64x16xf32>
    %43 = arith.addf %40, %42 : vector<64x16xf32>
    %c0_30 = arith.constant 0 : index
    %c0_31 = arith.constant 0 : index
    %44 = vector.load %arg12[%c0_30, %c0_31] : memref<64x16xf32, #tpu.memory_space<vmem>>, vector<64x16xf32>
    tpu.vector_store %arg12[%c0_30, %c0_31], %43 {strides = array<i32>} : memref<64x16xf32, #tpu.memory_space<vmem>>, vector<64x16xf32>,
    return
  }
  func.func @transform_0(%arg0: i32) -> (i32, i32) {
    %c0_i32 = arith.constant 0 : i32
    %c0_i32_0 = arith.constant 0 : i32
    return %arg0, %c0_i32 : i32, i32
  }
  func.func @transform_1(%arg0: i32) -> (i32, i32) {
    %c0_i32 = arith.constant 0 : i32
    %c0_i32_0 = arith.constant 0 : i32
    return %arg0, %c0_i32 : i32, i32
  }
  func.func @transform_2(%arg0: i32) -> (i32, i32) {
    %c0_i32 = arith.constant 0 : i32
    %c0_i32_0 = arith.constant 0 : i32
    return %arg0, %c0_i32 : i32, i32
  }
  func.func @transform_3(%arg0: i32) -> (i32, i32) {
    %c0_i32 = arith.constant 0 : i32
    %c0_i32_0 = arith.constant 0 : i32
    %c0_i32_1 = arith.constant 0 : i32
    return %c0_i32, %c0_i32_0 : i32, i32
  }
  func.func @transform_4(%arg0: i32) -> (i32, i32) {
    %c0_i32 = arith.constant 0 : i32
    %c0_i32_0 = arith.constant 0 : i32
    %c0_i32_1 = arith.constant 0 : i32
    return %c0_i32, %c0_i32_0 : i32, i32
  }
  func.func @transform_5(%arg0: i32) -> (i32, i32) {
    %c0_i32 = arith.constant 0 : i32
    %c0_i32_0 = arith.constant 0 : i32
    %c0_i32_1 = arith.constant 0 : i32
    return %c0_i32, %c0_i32_0 : i32, i32
  }
  func.func @transform_6(%arg0: i32) -> (i32, i32) {
    %c0_i32 = arith.constant 0 : i32
    %c0_i32_0 = arith.constant 0 : i32
    %c0_i32_1 = arith.constant 0 : i32
    return %c0_i32, %c0_i32_0 : i32, i32
  }
  func.func @transform_7(%arg0: i32) -> (i32, i32) {
    %c0_i32 = arith.constant 0 : i32
    %c0_i32_0 = arith.constant 0 : i32
    %c0_i32_1 = arith.constant 0 : i32
    return %c0_i32, %c0_i32_0 : i32, i32
  }
  func.func @transform_8(%arg0: i32) -> (i32, i32) {
    %c0_i32 = arith.constant 0 : i32
    %c0_i32_0 = arith.constant 0 : i32
    %c0_i32_1 = arith.constant 0 : i32
    return %c0_i32, %c0_i32_0 : i32, i32
  }
  func.func @transform_9(%arg0: i32) -> (i32, i32) {
    %c0_i32 = arith.constant 0 : i32
    %c0_i32_0 = arith.constant 0 : i32
    %c0_i32_1 = arith.constant 0 : i32
    return %c0_i32, %c0_i32_0 : i32, i32
  }
  func.func @transform_10(%arg0: i32) -> (i32, i32) {
    %c0_i32 = arith.constant 0 : i32
    %c0_i32_0 = arith.constant 0 : i32
    %c0_i32_1 = arith.constant 0 : i32
    return %c0_i32, %c0_i32_0 : i32, i32
  }
  func.func @transform_11(%arg0: i32) -> (i32, i32) {
    %c0_i32 = arith.constant 0 : i32
    %c0_i32_0 = arith.constant 0 : i32
    return %arg0, %c0_i32 : i32, i32
  }
}

</mosaic_0001>

<llo_original>
// kernel: tpu_custom_call.1
$region0: #{tpu_custom_call.1}
  #allocation0 [shape = 'u32[]', space=smem, size = 0x4, offset = 0x4, fixed_abs, tag = 'smem constant byte address 0x4 - core index']
  #allocation1 [shape = 'u32[144,128]{1,0:T(1,128)}', space=vmem, size = 0x12000, scoped, tag = 'internal scratch']
  %s0 = inlined_call_operand.vmem [shape: bf16[128,8], index: 0, kind: input, shape index: {}]
  %s1 = inlined_call_operand.vmem [shape: bf16[128,8], index: 1, kind: input, shape index: {}]
  %s2 = inlined_call_operand.vmem [shape: bf16[128,4], index: 2, kind: input, shape index: {}]
  %s3 = inlined_call_operand.vmem [shape: bf16[8,32], index: 3, kind: input, shape index: {}]
  %s4 = inlined_call_operand.vmem [shape: bf16[8,32], index: 4, kind: input, shape index: {}]
  %s5 = inlined_call_operand.vmem [shape: bf16[4,32], index: 5, kind: input, shape index: {}]
  %s6 = inlined_call_operand.vmem [shape: f32[1,32], index: 6, kind: input, shape index: {}]
  %s7 = inlined_call_operand.vmem [shape: f32[1,32], index: 7, kind: input, shape index: {}]
  %s8 = inlined_call_operand.vmem [shape: f32[1,32], index: 8, kind: input, shape index: {}]
  %s9 = inlined_call_operand.vmem [shape: bf16[32,16], index: 9, kind: input, shape index: {}]
  %s10 = inlined_call_operand.vmem [shape: f32[1,16], index: 10, kind: input, shape index: {}]
  %s11 = inlined_call_operand.vmem [shape: f32[128,16], index: 11, kind: output, shape index: {}]
  %s12 = sld [smem:[#allocation0]]
  $region77: #{tpu_custom_call.1} parent=0
    _
  %s14 = ssub.s32 1, %s12
  %s15 = scalar_select 0, %s14, %s12
  loop: start=0, step=1, limit=4
  $region2: #{tpu_custom_call.1} parent=0 // loop_pre_header
    _
  $region3: #{tpu_custom_call.1} parent=0 // loop_header
    %s17 = sphi 0, %s21
    %p18 = scmp.ge.s32.totalorder %s17, 4
    %s27 = sphi 0, %s29
    %s30 = sphi 0, %s27
    %s31 = sphi 0, %s30
    %s47 = sphi 0, %s31
    %s53 = sphi 0, %s55
    %s56 = sphi 0, %s53
    %s57 = sphi 0, %s56
    %s73 = sphi 0, %s57
    %s79 = sphi 0, %s81
    %s82 = sphi 0, %s79
    %s83 = sphi 0, %s82
    %s99 = sphi 0, %s83
    %s103 = sphi 0, %s103
    %s105 = sphi 0, %s103
    %s106 = sphi 0, %s105
    %s120 = sphi 0, %s106
    %s124 = sphi 0, %s124
    %s126 = sphi 0, %s124
    %s127 = sphi 0, %s126
    %s141 = sphi 0, %s127
    %s145 = sphi 0, %s145
    %s147 = sphi 0, %s145
    %s148 = sphi 0, %s147
    %s162 = sphi 0, %s148
    %s166 = sphi 0, %s166
    %s168 = sphi 0, %s166
    %s169 = sphi 0, %s168
    %s183 = sphi 0, %s169
    %s187 = sphi 0, %s187
    %s189 = sphi 0, %s187
    %s190 = sphi 0, %s189
    %s204 = sphi 0, %s190
    %s208 = sphi 0, %s208
    %s210 = sphi 0, %s208
    %s211 = sphi 0, %s210
    %s225 = sphi 0, %s211
    %s229 = sphi 0, %s229
    %s231 = sphi 0, %s229
    %s232 = sphi 0, %s231
    %s246 = sphi 0, %s232
    %s250 = sphi 0, %s250
    %s252 = sphi 0, %s250
    %s253 = sphi 0, %s252
    %s267 = sphi 0, %s253
    %s273 = sphi 0, %s275
    %s276 = sphi 0, %s273
    %s277 = sphi 0, %s276
    %s293 = sphi 0, %s277
  $region4: #{tpu_custom_call.1} parent=0 // loop_header_branch
    %20 = sbr.rel (%p18) target = $region8
  $region5: #{tpu_custom_call.1} parent=0 // loop_body
    %s22 = ssub.s32 %s17, 1
    %s23 = ssub.s32 %s17, 2
    %s24 = sadd.s32 %s17, 1
    %s25 = ssub.s32 %s17, %s24
    %p26 = scmp.eq.s32.totalorder %s25, 0
    %s28 = sadd.s32 %s27, 1
    %s29 = scalar_select %p26, %s27, %s28
    %p32 = pneg %p26
    %p33 = scmp.eq.s32.totalorder %s17, 1
    %p34 = por %p32, %p33
    %p35 = scmp.ne.s32.totalorder %s27, %s30
    %p36 = scmp.eq.s32.totalorder %s17, 0
    %p37 = por %p35, %p36
    %p38 = scmp.ne.s32.totalorder %s27, %s30
    %p39 = scmp.eq.s32.totalorder %s22, 1
    %p40 = por %p38, %p39
    %p41 = scmp.ne.s32.totalorder %s30, %s31
    %p42 = scmp.eq.s32.totalorder %s22, 0
    %p43 = por %p41, %p42
    %p44 = scmp.ne.s32.totalorder %s30, %s31
    %p45 = scmp.eq.s32.totalorder %s23, 1
    %p46 = por %p44, %p45
    %p48 = scmp.ne.s32.totalorder %s31, %s47
    %p49 = scmp.eq.s32.totalorder %s23, 0
    %p50 = por %p48, %p49
    %s51 = ssub.s32 %s17, %s24
    %p52 = scmp.eq.s32.totalorder %s51, 0
    %s54 = sadd.s32 %s53, 1
    %s55 = scalar_select %p52, %s53, %s54
    %p58 = pneg %p52
    %p59 = scmp.eq.s32.totalorder %s17, 1
    %p60 = por %p58, %p59
    %p61 = scmp.ne.s32.totalorder %s53, %s56
    %p62 = scmp.eq.s32.totalorder %s17, 0
    %p63 = por %p61, %p62
    %p64 = scmp.ne.s32.totalorder %s53, %s56
    %p65 = scmp.eq.s32.totalorder %s22, 1
    %p66 = por %p64, %p65
    %p67 = scmp.ne.s32.totalorder %s56, %s57
    %p68 = scmp.eq.s32.totalorder %s22, 0
    %p69 = por %p67, %p68
    %p70 = scmp.ne.s32.totalorder %s56, %s57
    %p71 = scmp.eq.s32.totalorder %s23, 1
    %p72 = por %p70, %p71
    %p74 = scmp.ne.s32.totalorder %s57, %s73
    %p75 = scmp.eq.s32.totalorder %s23, 0
    %p76 = por %p74, %p75
    %s77 = ssub.s32 %s17, %s24
    %p78 = scmp.eq.s32.totalorder %s77, 0
    %s80 = sadd.s32 %s79, 1
    %s81 = scalar_select %p78, %s79, %s80
    %p84 = pneg %p78
    %p85 = scmp.eq.s32.totalorder %s17, 1
    %p86 = por %p84, %p85
    %p87 = scmp.ne.s32.totalorder %s79, %s82
    %p88 = scmp.eq.s32.totalorder %s17, 0
    %p89 = por %p87, %p88
    %p90 = scmp.ne.s32.totalorder %s79, %s82
    %p91 = scmp.eq.s32.totalorder %s22, 1
    %p92 = por %p90, %p91
    %p93 = scmp.ne.s32.totalorder %s82, %s83
    %p94 = scmp.eq.s32.totalorder %s22, 0
    %p95 = por %p93, %p94
    %p96 = scmp.ne.s32.totalorder %s82, %s83
    %p97 = scmp.eq.s32.totalorder %s23, 1
    %p98 = por %p96, %p97
    %p100 = scmp.ne.s32.totalorder %s83, %s99
    %p101 = scmp.eq.s32.totalorder %s23, 0
    %p102 = por %p100, %p101
    %s104 = sadd.s32 %s103, 1
    %p107 = scmp.eq.s32.totalorder %s17, 1
    %p108 = scmp.ne.s32.totalorder %s103, %s105
    %p109 = scmp.eq.s32.totalorder %s17, 0
    %p110 = por %p108, %p109
    %p111 = scmp.ne.s32.totalorder %s103, %s105
    %p112 = scmp.eq.s32.totalorder %s22, 1
    %p113 = por %p111, %p112
    %p114 = scmp.ne.s32.totalorder %s105, %s106
    %p115 = scmp.eq.s32.totalorder %s22, 0
    %p116 = por %p114, %p115
    %p117 = scmp.ne.s32.totalorder %s105, %s106
    %p118 = scmp.eq.s32.totalorder %s23, 1
    %p119 = por %p117, %p118
    %p121 = scmp.ne.s32.totalorder %s106, %s120
    %p122 = scmp.eq.s32.totalorder %s23, 0
    %p123 = por %p121, %p122
    %s125 = sadd.s32 %s124, 1
    %p128 = scmp.eq.s32.totalorder %s17, 1
    %p129 = scmp.ne.s32.totalorder %s124, %s126
    %p130 = scmp.eq.s32.totalorder %s17, 0
    %p131 = por %p129, %p130
    %p132 = scmp.ne.s32.totalorder %s124, %s126
    %p133 = scmp.eq.s32.totalorder %s22, 1
    %p134 = por %p132, %p133
    %p135 = scmp.ne.s32.totalorder %s126, %s127
    %p136 = scmp.eq.s32.totalorder %s22, 0
    %p137 = por %p135, %p136
    %p138 = scmp.ne.s32.totalorder %s126, %s127
    %p139 = scmp.eq.s32.totalorder %s23, 1
    %p140 = por %p138, %p139
    %p142 = scmp.ne.s32.totalorder %s127, %s141
    %p143 = scmp.eq.s32.totalorder %s23, 0
    %p144 = por %p142, %p143
    %s146 = sadd.s32 %s145, 1
    %p149 = scmp.eq.s32.totalorder %s17, 1
    %p150 = scmp.ne.s32.totalorder %s145, %s147
    %p151 = scmp.eq.s32.totalorder %s17, 0
    %p152 = por %p150, %p151
    %p153 = scmp.ne.s32.totalorder %s145, %s147
    %p154 = scmp.eq.s32.totalorder %s22, 1
    %p155 = por %p153, %p154
    %p156 = scmp.ne.s32.totalorder %s147, %s148
    %p157 = scmp.eq.s32.totalorder %s22, 0
    %p158 = por %p156, %p157
    %p159 = scmp.ne.s32.totalorder %s147, %s148
    %p160 = scmp.eq.s32.totalorder %s23, 1
    %p161 = por %p159, %p160
    %p163 = scmp.ne.s32.totalorder %s148, %s162
    %p164 = scmp.eq.s32.totalorder %s23, 0
    %p165 = por %p163, %p164
    %s167 = sadd.s32 %s166, 1
    %p170 = scmp.eq.s32.totalorder %s17, 1
    %p171 = scmp.ne.s32.totalorder %s166, %s168
    %p172 = scmp.eq.s32.totalorder %s17, 0
    %p173 = por %p171, %p172
    %p174 = scmp.ne.s32.totalorder %s166, %s168
    %p175 = scmp.eq.s32.totalorder %s22, 1
    %p176 = por %p174, %p175
    %p177 = scmp.ne.s32.totalorder %s168, %s169
    %p178 = scmp.eq.s32.totalorder %s22, 0
    %p179 = por %p177, %p178
    %p180 = scmp.ne.s32.totalorder %s168, %s169
    %p181 = scmp.eq.s32.totalorder %s23, 1
    %p182 = por %p180, %p181
    %p184 = scmp.ne.s32.totalorder %s169, %s183
    %p185 = scmp.eq.s32.totalorder %s23, 0
    %p186 = por %p184, %p185
    %s188 = sadd.s32 %s187, 1
    %p191 = scmp.eq.s32.totalorder %s17, 1
    %p192 = scmp.ne.s32.totalorder %s187, %s189
    %p193 = scmp.eq.s32.totalorder %s17, 0
    %p194 = por %p192, %p193
    %p195 = scmp.ne.s32.totalorder %s187, %s189
    %p196 = scmp.eq.s32.totalorder %s22, 1
    %p197 = por %p195, %p196
    %p198 = scmp.ne.s32.totalorder %s189, %s190
    %p199 = scmp.eq.s32.totalorder %s22, 0
    %p200 = por %p198, %p199
    %p201 = scmp.ne.s32.totalorder %s189, %s190
    %p202 = scmp.eq.s32.totalorder %s23, 1
    %p203 = por %p201, %p202
    %p205 = scmp.ne.s32.totalorder %s190, %s204
    %p206 = scmp.eq.s32.totalorder %s23, 0
    %p207 = por %p205, %p206
    %s209 = sadd.s32 %s208, 1
    %p212 = scmp.eq.s32.totalorder %s17, 1
    %p213 = scmp.ne.s32.totalorder %s208, %s210
    %p214 = scmp.eq.s32.totalorder %s17, 0
    %p215 = por %p213, %p214
    %p216 = scmp.ne.s32.totalorder %s208, %s210
    %p217 = scmp.eq.s32.totalorder %s22, 1
    %p218 = por %p216, %p217
    %p219 = scmp.ne.s32.totalorder %s210, %s211
    %p220 = scmp.eq.s32.totalorder %s22, 0
    %p221 = por %p219, %p220
    %p222 = scmp.ne.s32.totalorder %s210, %s211
    %p223 = scmp.eq.s32.totalorder %s23, 1
    %p224 = por %p222, %p223
    %p226 = scmp.ne.s32.totalorder %s211, %s225
    %p227 = scmp.eq.s32.totalorder %s23, 0
    %p228 = por %p226, %p227
    %s230 = sadd.s32 %s229, 1
    %p233 = scmp.eq.s32.totalorder %s17, 1
    %p234 = scmp.ne.s32.totalorder %s229, %s231
    %p235 = scmp.eq.s32.totalorder %s17, 0
    %p236 = por %p234, %p235
    %p237 = scmp.ne.s32.totalorder %s229, %s231
    %p238 = scmp.eq.s32.totalorder %s22, 1
    %p239 = por %p237, %p238
    %p240 = scmp.ne.s32.totalorder %s231, %s232
    %p241 = scmp.eq.s32.totalorder %s22, 0
    %p242 = por %p240, %p241
    %p243 = scmp.ne.s32.totalorder %s231, %s232
    %p244 = scmp.eq.s32.totalorder %s23, 1
    %p245 = por %p243, %p244
    %p247 = scmp.ne.s32.totalorder %s232, %s246
    %p248 = scmp.eq.s32.totalorder %s23, 0
    %p249 = por %p247, %p248
    %s251 = sadd.s32 %s250, 1
    %p254 = scmp.eq.s32.totalorder %s17, 1
    %p255 = scmp.ne.s32.totalorder %s250, %s252
    %p256 = scmp.eq.s32.totalorder %s17, 0
    %p257 = por %p255, %p256
    %p258 = scmp.ne.s32.totalorder %s250, %s252
    %p259 = scmp.eq.s32.totalorder %s22, 1
    %p260 = por %p258, %p259
    %p261 = scmp.ne.s32.totalorder %s252, %s253
    %p262 = scmp.eq.s32.totalorder %s22, 0
    %p263 = por %p261, %p262
    %p264 = scmp.ne.s32.totalorder %s252, %s253
    %p265 = scmp.eq.s32.totalorder %s23, 1
    %p266 = por %p264, %p265
    %p268 = scmp.ne.s32.totalorder %s253, %s267
    %p269 = scmp.eq.s32.totalorder %s23, 0
    %p270 = por %p268, %p269
    %s271 = ssub.s32 %s17, %s24
    %p272 = scmp.eq.s32.totalorder %s271, 0
    %s274 = sadd.s32 %s273, 1
    %s275 = scalar_select %p272, %s273, %s274
    %p278 = pneg %p272
    %p279 = scmp.eq.s32.totalorder %s17, 1
    %p280 = por %p278, %p279
    %p281 = scmp.ne.s32.totalorder %s273, %s276
    %p282 = scmp.eq.s32.totalorder %s17, 0
    %p283 = por %p281, %p282
    %p284 = scmp.ne.s32.totalorder %s273, %s276
    %p285 = scmp.eq.s32.totalorder %s22, 1
    %p286 = por %p284, %p285
    %p287 = scmp.ne.s32.totalorder %s276, %s277
    %p288 = scmp.eq.s32.totalorder %s22, 0
    %p289 = por %p287, %p288
    %p290 = scmp.ne.s32.totalorder %s276, %s277
    %p291 = scmp.eq.s32.totalorder %s23, 1
    %p292 = por %p290, %p291
    %p294 = scmp.ne.s32.totalorder %s277, %s293
    %p295 = scmp.eq.s32.totalorder %s23, 0
    %p296 = por %p294, %p295
    %p297 = scmp.le.s32.totalorder 1, %s17
    %p298 = scmp.lt.s32.totalorder %s17, 3
    %p299 = pnand %p297, %p298
    %p300 = pneg %p299
    // Predicated region
    $region9: #{tpu_custom_call.1} parent=5 // pred_check
      _
    $region10: #{tpu_custom_call.1} parent=5 // pred_check_branch
      %302 = sbr.rel (%p299) target = $region12
    $region11: #{tpu_custom_call.1} parent=5 // pred_region
      %s303 = ssub.s32 %s17, 1
      // Predicated region
      $region13: #{tpu_custom_call.1} parent=11 // pred_check
        %p304 = pneg %p116
      $region14: #{tpu_custom_call.1} parent=11 // pred_check_branch
        %306 = sbr.rel (%p304) target = $region16
      $region15: #{tpu_custom_call.1} parent=11 // pred_region
        _
      $region16: #{tpu_custom_call.1} parent=11 // pred_fallthru
        _
      // Predicated region
      $region17: #{tpu_custom_call.1} parent=11 // pred_check
        %p307 = pneg %p137
      $region18: #{tpu_custom_call.1} parent=11 // pred_check_branch
        %309 = sbr.rel (%p307) target = $region20
      $region19: #{tpu_custom_call.1} parent=11 // pred_region
        _
      $region20: #{tpu_custom_call.1} parent=11 // pred_fallthru
        _
      // Predicated region
      $region21: #{tpu_custom_call.1} parent=11 // pred_check
        %p310 = pneg %p158
      $region22: #{tpu_custom_call.1} parent=11 // pred_check_branch
        %312 = sbr.rel (%p310) target = $region24
      $region23: #{tpu_custom_call.1} parent=11 // pred_region
        _
      $region24: #{tpu_custom_call.1} parent=11 // pred_fallthru
        _
      // Predicated region
      $region25: #{tpu_custom_call.1} parent=11 // pred_check
        %p313 = pneg %p179
      $region26: #{tpu_custom_call.1} parent=11 // pred_check_branch
        %315 = sbr.rel (%p313) target = $region28
      $region27: #{tpu_custom_call.1} parent=11 // pred_region
        _
      $region28: #{tpu_custom_call.1} parent=11 // pred_fallthru
        _
      // Predicated region
      $region29: #{tpu_custom_call.1} parent=11 // pred_check
        %p316 = pneg %p200
      $region30: #{tpu_custom_call.1} parent=11 // pred_check_branch
        %318 = sbr.rel (%p316) target = $region32
      $region31: #{tpu_custom_call.1} parent=11 // pred_region
        _
      $region32: #{tpu_custom_call.1} parent=11 // pred_fallthru
        _
      // Predicated region
      $region33: #{tpu_custom_call.1} parent=11 // pred_check
        %p319 = pneg %p221
      $region34: #{tpu_custom_call.1} parent=11 // pred_check_branch
        %321 = sbr.rel (%p319) target = $region36
      $region35: #{tpu_custom_call.1} parent=11 // pred_region
        _
      $region36: #{tpu_custom_call.1} parent=11 // pred_fallthru
        _
      // Predicated region
      $region37: #{tpu_custom_call.1} parent=11 // pred_check
        %p322 = pneg %p242
      $region38: #{tpu_custom_call.1} parent=11 // pred_check_branch
        %324 = sbr.rel (%p322) target = $region40
      $region39: #{tpu_custom_call.1} parent=11 // pred_region
        _
      $region40: #{tpu_custom_call.1} parent=11 // pred_fallthru
        _
      // Predicated region
      $region41: #{tpu_custom_call.1} parent=11 // pred_check
        %p325 = pneg %p263
      $region42: #{tpu_custom_call.1} parent=11 // pred_check_branch
        %327 = sbr.rel (%p325) target = $region44
      $region43: #{tpu_custom_call.1} parent=11 // pred_region
        _
      $region44: #{tpu_custom_call.1} parent=11 // pred_fallthru
        _
    $region12: #{tpu_custom_call.1} parent=5 // pred_fallthru
      _
    %p328 = scmp.lt.s32.totalorder %s17, 2
    // Predicated region
    $region45: #{tpu_custom_call.1} parent=5 // pred_check
      %p329 = pneg %p328
    $region46: #{tpu_custom_call.1} parent=5 // pred_check_branch
      %331 = sbr.rel (%p329) target = $region48
    $region47: #{tpu_custom_call.1} parent=5 // pred_region
      // Predicated region
      $region49: #{tpu_custom_call.1} parent=47 // pred_check
        %p332 = pneg %p37
      $region50: #{tpu_custom_call.1} parent=47 // pred_check_branch
        %334 = sbr.rel (%p332) target = $region52
      $region51: #{tpu_custom_call.1} parent=47 // pred_region
        %s335 = smul.u32 8, %s17
        %p336 = scmp.lt.s32.totalorder %s335, 15
        %s337 = scalar_select %p336, %s335, 15
        %s338 = smul.addr %s337, 4
        %s339 = scalar_lea.vmem %s0, %s338
        %s340 = smul.u32 8, %s17
      $region52: #{tpu_custom_call.1} parent=47 // pred_fallthru
        _
      // Predicated region
      $region53: #{tpu_custom_call.1} parent=47 // pred_check
        %p341 = pneg %p63
      $region54: #{tpu_custom_call.1} parent=47 // pred_check_branch
        %343 = sbr.rel (%p341) target = $region56
      $region55: #{tpu_custom_call.1} parent=47 // pred_region
        %s344 = smul.u32 8, %s17
        %p345 = scmp.lt.s32.totalorder %s344, 15
        %s346 = scalar_select %p345, %s344, 15
        %s347 = smul.addr %s346, 4
        %s348 = scalar_lea.vmem %s1, %s347
        %s349 = smul.u32 8, %s17
      $region56: #{tpu_custom_call.1} parent=47 // pred_fallthru
        _
      // Predicated region
      $region57: #{tpu_custom_call.1} parent=47 // pred_check
        %p350 = pneg %p89
      $region58: #{tpu_custom_call.1} parent=47 // pred_check_branch
        %352 = sbr.rel (%p350) target = $region60
      $region59: #{tpu_custom_call.1} parent=47 // pred_region
        %s353 = smul.u32 8, %s17
        %p354 = scmp.lt.s32.totalorder %s353, 15
        %s355 = scalar_select %p354, %s353, 15
        %s356 = smul.addr %s355, 4
        %s357 = scalar_lea.vmem %s2, %s356
        %s358 = smul.u32 8, %s17
      $region60: #{tpu_custom_call.1} parent=47 // pred_fallthru
        _
    $region48: #{tpu_custom_call.1} parent=5 // pred_fallthru
      _
    %p359 = scmp.le.s32.totalorder 1, %s17
    %p360 = scmp.lt.s32.totalorder %s17, 3
    %p361 = pnand %p359, %p360
    %p362 = pneg %p361
    // Predicated region
    $region61: #{tpu_custom_call.1} parent=5 // pred_check
      _
    $region62: #{tpu_custom_call.1} parent=5 // pred_check_branch
      %364 = sbr.rel (%p361) target = $region64
    $region63: #{tpu_custom_call.1} parent=5 // pred_region
      %s365 = ssub.s32 %s17, 1
      %s366 = smul.u32 8, %s22
      %p367 = scmp.lt.s32.totalorder %s366, 15
      %s368 = scalar_select %p367, %s366, 15
      %s369 = smul.addr %s368, 4
      %s370 = scalar_lea.vmem %s0, %s369
      %p371 = pneg %p43
      %p372 = pneg %p40
      %s373 = smul.u32 8, %s22
      %p374 = scmp.lt.s32.totalorder %s373, 15
      %s375 = scalar_select %p374, %s373, 15
      %s376 = smul.addr %s375, 4
      %s377 = scalar_lea.vmem %s1, %s376
      %p378 = pneg %p69
      %p379 = pneg %p66
      %s380 = smul.u32 8, %s22
      %p381 = scmp.lt.s32.totalorder %s380, 15
      %s382 = scalar_select %p381, %s380, 15
      %s383 = smul.addr %s382, 4
      %s384 = scalar_lea.vmem %s2, %s383
      %p385 = pneg %p95
      %p386 = pneg %p92
      %p387 = pneg %p116
      %p388 = pneg %p113
      %p389 = pneg %p137
      %p390 = pneg %p134
      %p391 = pneg %p158
      %p392 = pneg %p155
      %p393 = pneg %p179
      %p394 = pneg %p176
      %p395 = pneg %p200
      %p396 = pneg %p197
      %p397 = pneg %p221
      %p398 = pneg %p218
      %p399 = pneg %p242
      %p400 = pneg %p239
      %p401 = pneg %p263
      %p402 = pneg %p260
      %p403 = pneg %p289
      %p404 = pneg %p286
      %s405 = smul.u32 8, %s22
      %p406 = scmp.lt.s32.totalorder %s405, 15
      %s407 = scalar_select %p406, %s405, 15
      %s408 = smul.addr %s407, 8
      %s409 = scalar_lea.vmem %s11, %s408
      %s410 = smul.u32 8, %s22
      %p411 = scmp.lt.s32.totalorder %s410, 15
      %s412 = scalar_select %p411, %s410, 15
      %s413 = smul.addr %s412, 4
      %s414 = scalar_lea.vmem %s0, %s413
      %s415 = smul.u32 8, %s22
      %s416 = smul.u32 8, %s22
      %p417 = scmp.lt.s32.totalorder %s416, 15
      %s418 = scalar_select %p417, %s416, 15
      %s419 = smul.addr %s418, 4
      %s420 = scalar_lea.vmem %s1, %s419
      %s421 = smul.u32 8, %s22
      %s422 = smul.u32 8, %s22
      %p423 = scmp.lt.s32.totalorder %s422, 15
      %s424 = scalar_select %p423, %s422, 15
      %s425 = smul.addr %s424, 4
      %s426 = scalar_lea.vmem %s2, %s425
      %s427 = smul.u32 8, %s22
      %s428 = smul.u32 8, %s22
      %p429 = scmp.lt.s32.totalorder %s428, 15
      %s430 = scalar_select %p429, %s428, 15
      %s431 = smul.addr %s430, 8
      %s432 = scalar_lea.vmem %s11, %s431
      %s433 = smul.u32 8, %s22
      %v435 = vld [vmem:[%s414] sm:$0xf]
      %v436 = vld [vmem:[%s414 + $0x4] sm:$0xf]
      %v437 = vld [vmem:[%s414 + $0x8] sm:$0xf]
      %v438 = vld [vmem:[%s414 + $0xc] sm:$0xf]
      %v439 = vld [vmem:[%s414 + $0x10] sm:$0xf]
      %v440 = vld [vmem:[%s414 + $0x14] sm:$0xf]
      %v441 = vld [vmem:[%s414 + $0x18] sm:$0xf]
      %v442 = vld [vmem:[%s414 + $0x1c] sm:$0xf]
      %v443 = vld [vmem:[%s3] sm:$0xf]
      %v444 = vld [vmem:[%s420] sm:$0xf]
      %v445 = vld [vmem:[%s420 + $0x4] sm:$0xf]
      %v446 = vld [vmem:[%s420 + $0x8] sm:$0xf]
      %v447 = vld [vmem:[%s420 + $0xc] sm:$0xf]
      %v448 = vld [vmem:[%s420 + $0x10] sm:$0xf]
      %v449 = vld [vmem:[%s420 + $0x14] sm:$0xf]
      %v450 = vld [vmem:[%s420 + $0x18] sm:$0xf]
      %v451 = vld [vmem:[%s420 + $0x1c] sm:$0xf]
      %v452 = vld [vmem:[%s4] sm:$0xf]
      %v461 = vunpack.c.l.b16 %v444
      %v462 = vunpack.c.l.b16 %v445
      %v463 = vunpack.c.l.b16 %v446
      %v464 = vunpack.c.l.b16 %v447
      %v465 = vunpack.c.l.b16 %v448
      %v466 = vunpack.c.l.b16 %v449
      %v467 = vunpack.c.l.b16 %v450
      %v468 = vunpack.c.l.b16 %v451
      %v469 = vpack.c.b16 %v462, %v461
      %v470 = vpack.c.b16 %v464, %v463
      %v471 = vpack.c.b16 %v466, %v465
      %v472 = vpack.c.b16 %v468, %v467
      %vm473 = vcmask 64512
      %v475 = vsel %vm473, %v469, 0
      %v478 = vsel %vm473, %v470, 0
      %v481 = vsel %vm473, %v471, 0
      %v484 = vsel %vm473, %v472, 0
      %vm486 = vcmask 1043456
      %v488 = vsel %vm486, %v452, 0
      %490 = vmatprep.subr.bf16.mxu0 0
      %491 = vmatpush1.bf16.msra.mxu0 %v488
      %492 = vmatprep.subr.bf16.mxu0 0
      %493 = vmatpush1.bf16.msra.mxu0 0
      %494 = vmatprep.subr.bf16.mxu0 0
      %495 = vmatpush1.bf16.msra.mxu0 0
      %496 = vmatprep.subr.bf16.mxu0 0
      %497 = vmatpush1.bf16.msra.mxu0 0
      %498 = vmatprep.subr.bf16.mxu0 0
      %499 = vmatpush1.bf16.msra.mxu0 0
      %500 = vmatprep.subr.bf16.mxu0 0
      %501 = vmatpush1.bf16.msra.mxu0 0
      %502 = vmatprep.subr.bf16.mxu0 0
      %503 = vmatpush1.bf16.msra.mxu0 0
      %504 = vmatprep.subr.bf16.mxu0 0
      %505 = vmatpush1.bf16.msra.mxu0 0
      %506 = vmatprep.subr.bf16.mxu0 0
      %507 = vmatpush1.bf16.msra.mxu0 0
      %508 = vmatprep.subr.bf16.mxu0 0
      %509 = vmatpush1.bf16.msra.mxu0 0
      %510 = vmatprep.subr.bf16.mxu0 0
      %511 = vmatpush1.bf16.msra.mxu0 0
      %512 = vmatprep.subr.bf16.mxu0 0
      %513 = vmatpush1.bf16.msra.mxu0 0
      %514 = vmatprep.subr.bf16.mxu0 0
      %515 = vmatpush1.bf16.msra.mxu0 0
      %516 = vmatprep.subr.bf16.mxu0 0
      %517 = vmatpush1.bf16.msra.mxu0 0
      %518 = vmatprep.subr.bf16.mxu0 0
      %519 = vmatpush1.bf16.msra.mxu0 0
      %520 = vmatprep.subr.bf16.mxu0 0
      %521 = vmatpush1.bf16.msra.mxu0 0
      %522 = vmatprep.mubr.bf16.mxu0 0
      %523 = vmatmul.mubr.bf16.gmra.mrb[0].mxu0 %v475
      %v524 = vpop.f32.mrb[0].mxu0
      %v525 = vadd.f32 0.0, %v524
      %v526 = vpop.f32.mrb[0].mxu0
      %v527 = vpop.f32.mrb[0].mxu0
      %v528 = vadd.f32 0.0, %v527
      %v529 = vpop.f32.mrb[0].mxu0
      %530 = vmatprep.mubr.bf16.mxu0 0
      %531 = vmatmul.mubr.bf16.gmra.mrb[0].mxu0 %v478
      %v532 = vpop.f32.mrb[0].mxu0
      %v533 = vadd.f32 0.0, %v532
      %v534 = vpop.f32.mrb[0].mxu0
      %v535 = vpop.f32.mrb[0].mxu0
      %v536 = vadd.f32 0.0, %v535
      %v537 = vpop.f32.mrb[0].mxu0
      %538 = vmatprep.mubr.bf16.mxu0 0
      %539 = vmatmul.mubr.bf16.gmra.mrb[0].mxu0 %v481
      %v540 = vpop.f32.mrb[0].mxu0
      %v541 = vadd.f32 0.0, %v540
      %v542 = vpop.f32.mrb[0].mxu0
      %v543 = vpop.f32.mrb[0].mxu0
      %v544 = vadd.f32 0.0, %v543
      %v545 = vpop.f32.mrb[0].mxu0
      %546 = vmatprep.mubr.bf16.mxu0 0
      %547 = vmatmul.mubr.bf16.gmra.mrb[0].mxu0 %v484
      %v548 = vpop.f32.mrb[0].mxu0
      %v549 = vadd.f32 0.0, %v548
      %v550 = vpop.f32.mrb[0].mxu0
      %v551 = vpop.f32.mrb[0].mxu0
      %v552 = vadd.f32 0.0, %v551
      %v553 = vpop.f32.mrb[0].mxu0
      %554 = vdwg.mxu0
      %v563 = vunpack.c.l.b16 %v435
      %v564 = vunpack.c.l.b16 %v436
      %v565 = vunpack.c.l.b16 %v437
      %v566 = vunpack.c.l.b16 %v438
      %v567 = vunpack.c.l.b16 %v439
      %v568 = vunpack.c.l.b16 %v440
      %v569 = vunpack.c.l.b16 %v441
      %v570 = vunpack.c.l.b16 %v442
      %v571 = vpack.c.b16 %v564, %v563
      %v572 = vpack.c.b16 %v566, %v565
      %v573 = vpack.c.b16 %v568, %v567
      %v574 = vpack.c.b16 %v570, %v569
      %v576 = vsel %vm473, %v571, 0
      %v579 = vsel %vm473, %v572, 0
      %v582 = vsel %vm473, %v573, 0
      %v585 = vsel %vm473, %v574, 0
      %v588 = vsel %vm486, %v443, 0
      %590 = vmatprep.subr.bf16.mxu0 0
      %591 = vmatpush1.bf16.msra.mxu0 %v588
      %592 = vmatprep.subr.bf16.mxu0 0
      %593 = vmatpush1.bf16.msra.mxu0 0
      %594 = vmatprep.subr.bf16.mxu0 0
      %595 = vmatpush1.bf16.msra.mxu0 0
      %596 = vmatprep.subr.bf16.mxu0 0
      %597 = vmatpush1.bf16.msra.mxu0 0
      %598 = vmatprep.subr.bf16.mxu0 0
      %599 = vmatpush1.bf16.msra.mxu0 0
      %600 = vmatprep.subr.bf16.mxu0 0
      %601 = vmatpush1.bf16.msra.mxu0 0
      %602 = vmatprep.subr.bf16.mxu0 0
      %603 = vmatpush1.bf16.msra.mxu0 0
      %604 = vmatprep.subr.bf16.mxu0 0
      %605 = vmatpush1.bf16.msra.mxu0 0
      %606 = vmatprep.subr.bf16.mxu0 0
      %607 = vmatpush1.bf16.msra.mxu0 0
      %608 = vmatprep.subr.bf16.mxu0 0
      %609 = vmatpush1.bf16.msra.mxu0 0
      %610 = vmatprep.subr.bf16.mxu0 0
      %611 = vmatpush1.bf16.msra.mxu0 0
      %612 = vmatprep.subr.bf16.mxu0 0
      %613 = vmatpush1.bf16.msra.mxu0 0
      %614 = vmatprep.subr.bf16.mxu0 0
      %615 = vmatpush1.bf16.msra.mxu0 0
      %616 = vmatprep.subr.bf16.mxu0 0
      %617 = vmatpush1.bf16.msra.mxu0 0
      %618 = vmatprep.subr.bf16.mxu0 0
      %619 = vmatpush1.bf16.msra.mxu0 0
      %620 = vmatprep.subr.bf16.mxu0 0
      %621 = vmatpush1.bf16.msra.mxu0 0
      %622 = vmatprep.mubr.bf16.mxu0 0
      %623 = vmatmul.mubr.bf16.gmra.mrb[0].mxu0 %v576
      %v624 = vpop.f32.mrb[0].mxu0
      %v625 = vadd.f32 %v525, %v624
      %v626 = vpop.f32.mrb[0].mxu0
      %v627 = vpop.f32.mrb[0].mxu0
      %v628 = vadd.f32 %v528, %v627
      %v629 = vpop.f32.mrb[0].mxu0
      %630 = vmatprep.mubr.bf16.mxu0 0
      %631 = vmatmul.mubr.bf16.gmra.mrb[0].mxu0 %v579
      %v632 = vpop.f32.mrb[0].mxu0
      %v633 = vadd.f32 %v533, %v632
      %v634 = vpop.f32.mrb[0].mxu0
      %v635 = vpop.f32.mrb[0].mxu0
      %v636 = vadd.f32 %v536, %v635
      %v637 = vpop.f32.mrb[0].mxu0
      %638 = vmatprep.mubr.bf16.mxu0 0
      %639 = vmatmul.mubr.bf16.gmra.mrb[0].mxu0 %v582
      %v640 = vpop.f32.mrb[0].mxu0
      %v641 = vadd.f32 %v541, %v640
      %v642 = vpop.f32.mrb[0].mxu0
      %v643 = vpop.f32.mrb[0].mxu0
      %v644 = vadd.f32 %v544, %v643
      %v645 = vpop.f32.mrb[0].mxu0
      %646 = vmatprep.mubr.bf16.mxu0 0
      %647 = vmatmul.mubr.bf16.gmra.mrb[0].mxu0 %v585
      %v648 = vpop.f32.mrb[0].mxu0
      %v649 = vadd.f32 %v549, %v648
      %v650 = vpop.f32.mrb[0].mxu0
      %v651 = vpop.f32.mrb[0].mxu0
      %v652 = vadd.f32 %v552, %v651
      %v653 = vpop.f32.mrb[0].mxu0
      %654 = vdwg.mxu0
      %v655 = vld [vmem:[%s426] sm:$0xf]
      %v656 = vld [vmem:[%s426 + $0x4] sm:$0xf]
      %v657 = vld [vmem:[%s426 + $0x8] sm:$0xf]
      %v658 = vld [vmem:[%s426 + $0xc] sm:$0xf]
      %v659 = vld [vmem:[%s426 + $0x10] sm:$0xf]
      %v660 = vld [vmem:[%s426 + $0x14] sm:$0xf]
      %v661 = vld [vmem:[%s426 + $0x18] sm:$0xf]
      %v662 = vld [vmem:[%s426 + $0x1c] sm:$0xf]
      %v663 = vld [vmem:[%s5] sm:$0x3]
      %v672 = vunpack.c.l.b16 %v655
      %v673 = vunpack.c.l.b16 %v656
      %v674 = vunpack.c.l.b16 %v657
      %v675 = vunpack.c.l.b16 %v658
      %v676 = vunpack.c.l.b16 %v659
      %v677 = vunpack.c.l.b16 %v660
      %v678 = vunpack.c.l.b16 %v661
      %v679 = vunpack.c.l.b16 %v662
      %v680 = vpack.c.b16 %v673, %v672
      %v681 = vpack.c.b16 %v675, %v674
      %v682 = vpack.c.b16 %v677, %v676
      %v683 = vpack.c.b16 %v679, %v678
      %vm684 = vcmask 31744
      %v686 = vsel %vm684, %v680, 0
      %v689 = vsel %vm684, %v681, 0
      %v692 = vsel %vm684, %v682, 0
      %v695 = vsel %vm684, %v683, 0
      %vm697 = vcmask 1041408
      %v699 = vsel %vm697, %v663, 0
      %701 = vmatprep.subr.bf16.mxu0 0
      %702 = vmatpush1.bf16.msra.mxu0 %v699
      %703 = vmatprep.subr.bf16.mxu0 0
      %704 = vmatpush1.bf16.msra.mxu0 0
      %705 = vmatprep.subr.bf16.mxu0 0
      %706 = vmatpush1.bf16.msra.mxu0 0
      %707 = vmatprep.subr.bf16.mxu0 0
      %708 = vmatpush1.bf16.msra.mxu0 0
      %709 = vmatprep.subr.bf16.mxu0 0
      %710 = vmatpush1.bf16.msra.mxu0 0
      %711 = vmatprep.subr.bf16.mxu0 0
      %712 = vmatpush1.bf16.msra.mxu0 0
      %713 = vmatprep.subr.bf16.mxu0 0
      %714 = vmatpush1.bf16.msra.mxu0 0
      %715 = vmatprep.subr.bf16.mxu0 0
      %716 = vmatpush1.bf16.msra.mxu0 0
      %717 = vmatprep.subr.bf16.mxu0 0
      %718 = vmatpush1.bf16.msra.mxu0 0
      %719 = vmatprep.subr.bf16.mxu0 0
      %720 = vmatpush1.bf16.msra.mxu0 0
      %721 = vmatprep.subr.bf16.mxu0 0
      %722 = vmatpush1.bf16.msra.mxu0 0
      %723 = vmatprep.subr.bf16.mxu0 0
      %724 = vmatpush1.bf16.msra.mxu0 0
      %725 = vmatprep.subr.bf16.mxu0 0
      %726 = vmatpush1.bf16.msra.mxu0 0
      %727 = vmatprep.subr.bf16.mxu0 0
      %728 = vmatpush1.bf16.msra.mxu0 0
      %729 = vmatprep.subr.bf16.mxu0 0
      %730 = vmatpush1.bf16.msra.mxu0 0
      %731 = vmatprep.subr.bf16.mxu0 0
      %732 = vmatpush1.bf16.msra.mxu0 0
      %733 = vmatprep.mubr.bf16.mxu0 0
      %734 = vmatmul.mubr.bf16.gmra.mrb[0].mxu0 %v686
      %v735 = vpop.f32.mrb[0].mxu0
      %v736 = vadd.f32 0.0, %v735
      %v737 = vpop.f32.mrb[0].mxu0
      %v738 = vpop.f32.mrb[0].mxu0
      %v739 = vadd.f32 0.0, %v738
      %v740 = vpop.f32.mrb[0].mxu0
      %741 = vmatprep.mubr.bf16.mxu0 0
      %742 = vmatmul.mubr.bf16.gmra.mrb[0].mxu0 %v689
      %v743 = vpop.f32.mrb[0].mxu0
      %v744 = vadd.f32 0.0, %v743
      %v745 = vpop.f32.mrb[0].mxu0
      %v746 = vpop.f32.mrb[0].mxu0
      %v747 = vadd.f32 0.0, %v746
      %v748 = vpop.f32.mrb[0].mxu0
      %749 = vmatprep.mubr.bf16.mxu0 0
      %750 = vmatmul.mubr.bf16.gmra.mrb[0].mxu0 %v692
      %v751 = vpop.f32.mrb[0].mxu0
      %v752 = vadd.f32 0.0, %v751
      %v753 = vpop.f32.mrb[0].mxu0
      %v754 = vpop.f32.mrb[0].mxu0
      %v755 = vadd.f32 0.0, %v754
      %v756 = vpop.f32.mrb[0].mxu0
      %757 = vmatprep.mubr.bf16.mxu0 0
      %758 = vmatmul.mubr.bf16.gmra.mrb[0].mxu0 %v695
      %v759 = vpop.f32.mrb[0].mxu0
      %v760 = vadd.f32 0.0, %v759
      %v761 = vpop.f32.mrb[0].mxu0
      %v762 = vpop.f32.mrb[0].mxu0
      %v763 = vadd.f32 0.0, %v762
      %v764 = vpop.f32.mrb[0].mxu0
      %765 = vdwg.mxu0
      %v766 = vadd.f32 %v625, %v736
      %v767 = vadd.f32 %v628, %v739
      %v768 = vadd.f32 %v633, %v744
      %v769 = vadd.f32 %v636, %v747
      %v770 = vadd.f32 %v641, %v752
      %v771 = vadd.f32 %v644, %v755
      %v772 = vadd.f32 %v649, %v760
      %v773 = vadd.f32 %v652, %v763
      %v774 = vld [vmem:[%s6] sm:$0x1]
      %v776 = vlaneseq
      %v777 = vshrl.u32 %v776, 7
      %v778 = vsub.s32 0, %v777
      %v779 = vrot.slane %v774, %v778
      %v781 = vadd.f32 %v766, %v779
      %v782 = vadd.f32 %v767, %v779
      %v783 = vadd.f32 %v768, %v779
      %v784 = vadd.f32 %v769, %v779
      %v785 = vadd.f32 %v770, %v779
      %v786 = vadd.f32 %v771, %v779
      %v787 = vadd.f32 %v772, %v779
      %v788 = vadd.f32 %v773, %v779
      %v789 = vmax.f32 %v781, 0.0
      %v790 = vmax.f32 %v782, 0.0
      %v791 = vmax.f32 %v783, 0.0
      %v792 = vmax.f32 %v784, 0.0
      %v793 = vmax.f32 %v785, 0.0
      %v794 = vmax.f32 %v786, 0.0
      %v795 = vmax.f32 %v787, 0.0
      %v796 = vmax.f32 %v788, 0.0
      %vm797 = vcmask 261120
      %v798 = vsel %vm797, %v789, 0.0
      %799 = vadd.xlane.f32.xlu0 %v798
      %v800 = vpop.xlane.xlu0 %799
      %v801 = vsel %vm797, %v790, 0.0
      %802 = vadd.xlane.f32.xlu0 %v801
      %v803 = vpop.xlane.xlu0 %802
      %v804 = vsel %vm797, %v791, 0.0
      %805 = vadd.xlane.f32.xlu0 %v804
      %v806 = vpop.xlane.xlu0 %805
      %v807 = vsel %vm797, %v792, 0.0
      %808 = vadd.xlane.f32.xlu0 %v807
      %v809 = vpop.xlane.xlu0 %808
      %v810 = vsel %vm797, %v793, 0.0
      %811 = vadd.xlane.f32.xlu0 %v810
      %v812 = vpop.xlane.xlu0 %811
      %v813 = vsel %vm797, %v794, 0.0
      %814 = vadd.xlane.f32.xlu0 %v813
      %v815 = vpop.xlane.xlu0 %814
      %v816 = vsel %vm797, %v795, 0.0
      %817 = vadd.xlane.f32.xlu0 %v816
      %v818 = vpop.xlane.xlu0 %817
      %v819 = vsel %vm797, %v796, 0.0
      %820 = vadd.xlane.f32.xlu0 %v819
      %v821 = vpop.xlane.xlu0 %820
      %v822 = vrcp.pop 32.0
      %v823 = vmul.f32 %v800, %v822
      %v824 = vmul.f32 %v803, %v822
      %v825 = vmul.f32 %v806, %v822
      %v826 = vmul.f32 %v809, %v822
      %v827 = vmul.f32 %v812, %v822
      %v828 = vmul.f32 %v815, %v822
      %v829 = vmul.f32 %v818, %v822
      %v830 = vmul.f32 %v821, %v822
      %v831 = vsub.f32 %v789, %v823
      %v832 = vsub.f32 %v790, %v824
      %v833 = vsub.f32 %v791, %v825
      %v834 = vsub.f32 %v792, %v826
      %v835 = vsub.f32 %v793, %v827
      %v836 = vsub.f32 %v794, %v828
      %v837 = vsub.f32 %v795, %v829
      %v838 = vsub.f32 %v796, %v830
      %v839 = vmul.f32 %v831, %v831
      %v840 = vmul.f32 %v832, %v832
      %v841 = vmul.f32 %v833, %v833
      %v842 = vmul.f32 %v834, %v834
      %v843 = vmul.f32 %v835, %v835
      %v844 = vmul.f32 %v836, %v836
      %v845 = vmul.f32 %v837, %v837
      %v846 = vmul.f32 %v838, %v838
      %v847 = vsel %vm797, %v839, 0.0
      %848 = vadd.xlane.f32.xlu0 %v847
      %v849 = vpop.xlane.xlu0 %848
      %v850 = vsel %vm797, %v840, 0.0
      %851 = vadd.xlane.f32.xlu0 %v850
      %v852 = vpop.xlane.xlu0 %851
      %v853 = vsel %vm797, %v841, 0.0
      %854 = vadd.xlane.f32.xlu0 %v853
      %v855 = vpop.xlane.xlu0 %854
      %v856 = vsel %vm797, %v842, 0.0
      %857 = vadd.xlane.f32.xlu0 %v856
      %v858 = vpop.xlane.xlu0 %857
      %v859 = vsel %vm797, %v843, 0.0
      %860 = vadd.xlane.f32.xlu0 %v859
      %v861 = vpop.xlane.xlu0 %860
      %v862 = vsel %vm797, %v844, 0.0
      %863 = vadd.xlane.f32.xlu0 %v862
      %v864 = vpop.xlane.xlu0 %863
      %v865 = vsel %vm797, %v845, 0.0
      %866 = vadd.xlane.f32.xlu0 %v865
      %v867 = vpop.xlane.xlu0 %866
      %v868 = vsel %vm797, %v846, 0.0
      %869 = vadd.xlane.f32.xlu0 %v868
      %v870 = vpop.xlane.xlu0 %869
      %v871 = vmul.f32 %v849, %v822
      %v872 = vmul.f32 %v852, %v822
      %v873 = vmul.f32 %v855, %v822
      %v874 = vmul.f32 %v858, %v822
      %v875 = vmul.f32 %v861, %v822
      %v876 = vmul.f32 %v864, %v822
      %v877 = vmul.f32 %v867, %v822
      %v878 = vmul.f32 %v870, %v822
      %v879 = vld [vmem:[%s7] sm:$0x1]
      %v880 = vadd.f32 %v871, 1e-05
      %v881 = vadd.f32 %v872, 1e-05
      %v882 = vadd.f32 %v873, 1e-05
      %v883 = vadd.f32 %v874, 1e-05
      %v884 = vadd.f32 %v875, 1e-05
      %v885 = vadd.f32 %v876, 1e-05
      %v886 = vadd.f32 %v877, 1e-05
      %v887 = vadd.f32 %v878, 1e-05
      %v888 = vrsqrt.pop %v880
      %v889 = vrsqrt.pop %v881
      %v890 = vrsqrt.pop %v882
      %v891 = vrsqrt.pop %v883
      %v892 = vrsqrt.pop %v884
      %v893 = vrsqrt.pop %v885
      %v894 = vrsqrt.pop %v886
      %v895 = vrsqrt.pop %v887
      %v897 = vlaneseq
      %v898 = vshrl.u32 %v897, 7
      %v899 = vsub.s32 0, %v898
      %v900 = vrot.slane %v879, %v899
      %v902 = vmul.f32 %v900, %v888
      %v903 = vmul.f32 %v900, %v889
      %v904 = vmul.f32 %v900, %v890
      %v905 = vmul.f32 %v900, %v891
      %v906 = vmul.f32 %v900, %v892
      %v907 = vmul.f32 %v900, %v893
      %v908 = vmul.f32 %v900, %v894
      %v909 = vmul.f32 %v900, %v895
      %v910 = vmul.f32 %v831, %v902
      %v911 = vmul.f32 %v832, %v903
      %v912 = vmul.f32 %v833, %v904
      %v913 = vmul.f32 %v834, %v905
      %v914 = vmul.f32 %v835, %v906
      %v915 = vmul.f32 %v836, %v907
      %v916 = vmul.f32 %v837, %v908
      %v917 = vmul.f32 %v838, %v909
      %v918 = vld [vmem:[%s8] sm:$0x1]
      %v920 = vlaneseq
      %v921 = vshrl.u32 %v920, 7
      %v922 = vsub.s32 0, %v921
      %v923 = vrot.slane %v918, %v922
      %v925 = vadd.f32 %v910, %v923
      %v926 = vadd.f32 %v911, %v923
      %v927 = vadd.f32 %v912, %v923
      %v928 = vadd.f32 %v913, %v923
      %v929 = vadd.f32 %v914, %v923
      %v930 = vadd.f32 %v915, %v923
      %v931 = vadd.f32 %v916, %v923
      %v932 = vadd.f32 %v917, %v923
      %v933 = vpack.c.bf16 %v926, %v925
      %v934 = vpack.c.bf16 %v928, %v927
      %v935 = vpack.c.bf16 %v930, %v929
      %v936 = vpack.c.bf16 %v932, %v931
      %v937 = vld [vmem:[%s9] sm:$0xf]
      %v938 = vld [vmem:[%s9 + $0x4] sm:$0xf]
      %v939 = vld [vmem:[%s9 + $0x8] sm:$0xf]
      %v940 = vld [vmem:[%s9 + $0xc] sm:$0xf]
      %v941 = vld [vmem:[%s10] sm:$0x1]
      %v943 = vlaneseq
      %v944 = vshrl.u32 %v943, 7
      %v945 = vsub.s32 0, %v944
      %v946 = vrot.slane %v941, %v945
      %v952 = vunpack.c.l.b16 %v937
      %v953 = vunpack.c.l.b16 %v938
      %v954 = vunpack.c.l.b16 %v939
      %v955 = vunpack.c.l.b16 %v940
      %v956 = vpack.c.b16 %v953, %v952
      %v957 = vpack.c.b16 %v955, %v954
      %v961 = vsel %vm797, %v933, 0
      %v964 = vsel %vm797, %v934, 0
      %v967 = vsel %vm797, %v935, 0
      %v970 = vsel %vm797, %v936, 0
      %972 = vmatprep.subr.bf16.mxu0 0
      %973 = vmatpush1.bf16.msra.mxu0 %v956
      %974 = vmatprep.subr.bf16.mxu0 0
      %975 = vmatpush1.bf16.msra.mxu0 %v957
      %976 = vmatprep.subr.bf16.mxu0 0
      %977 = vmatpush1.bf16.msra.mxu0 0
      %978 = vmatprep.subr.bf16.mxu0 0
      %979 = vmatpush1.bf16.msra.mxu0 0
      %980 = vmatprep.subr.bf16.mxu0 0
      %981 = vmatpush1.bf16.msra.mxu0 0
      %982 = vmatprep.subr.bf16.mxu0 0
      %983 = vmatpush1.bf16.msra.mxu0 0
      %984 = vmatprep.subr.bf16.mxu0 0
      %985 = vmatpush1.bf16.msra.mxu0 0
      %986 = vmatprep.subr.bf16.mxu0 0
      %987 = vmatpush1.bf16.msra.mxu0 0
      %988 = vmatprep.subr.bf16.mxu0 0
      %989 = vmatpush1.bf16.msra.mxu0 0
      %990 = vmatprep.subr.bf16.mxu0 0
      %991 = vmatpush1.bf16.msra.mxu0 0
      %992 = vmatprep.subr.bf16.mxu0 0
      %993 = vmatpush1.bf16.msra.mxu0 0
      %994 = vmatprep.subr.bf16.mxu0 0
      %995 = vmatpush1.bf16.msra.mxu0 0
      %996 = vmatprep.subr.bf16.mxu0 0
      %997 = vmatpush1.bf16.msra.mxu0 0
      %998 = vmatprep.subr.bf16.mxu0 0
      %999 = vmatpush1.bf16.msra.mxu0 0
      %1000 = vmatprep.subr.bf16.mxu0 0
      %1001 = vmatpush1.bf16.msra.mxu0 0
      %1002 = vmatprep.subr.bf16.mxu0 0
      %1003 = vmatpush1.bf16.msra.mxu0 0
      %1004 = vmatprep.mubr.bf16.mxu0 0
      %1005 = vmatmul.mubr.bf16.gmra.mrb[0].mxu0 %v961
      %v1006 = vpop.f32.mrb[0].mxu0
      %v1007 = vadd.f32 %v946, %v1006
      %v1008 = vpop.f32.mrb[0].mxu0
      %v1009 = vpop.f32.mrb[0].mxu0
      %v1010 = vadd.f32 %v946, %v1009
      %v1011 = vpop.f32.mrb[0].mxu0
      %1012 = vmatprep.mubr.bf16.mxu0 0
      %1013 = vmatmul.mubr.bf16.gmra.mrb[0].mxu0 %v964
      %v1014 = vpop.f32.mrb[0].mxu0
      %v1015 = vadd.f32 %v946, %v1014
      %v1016 = vpop.f32.mrb[0].mxu0
      %v1017 = vpop.f32.mrb[0].mxu0
      %v1018 = vadd.f32 %v946, %v1017
      %v1019 = vpop.f32.mrb[0].mxu0
      %1020 = vmatprep.mubr.bf16.mxu0 0
      %1021 = vmatmul.mubr.bf16.gmra.mrb[0].mxu0 %v967
      %v1022 = vpop.f32.mrb[0].mxu0
      %v1023 = vadd.f32 %v946, %v1022
      %v1024 = vpop.f32.mrb[0].mxu0
      %v1025 = vpop.f32.mrb[0].mxu0
      %v1026 = vadd.f32 %v946, %v1025
      %v1027 = vpop.f32.mrb[0].mxu0
      %1028 = vmatprep.mubr.bf16.mxu0 0
      %1029 = vmatmul.mubr.bf16.gmra.mrb[0].mxu0 %v970
      %v1030 = vpop.f32.mrb[0].mxu0
      %v1031 = vadd.f32 %v946, %v1030
      %v1032 = vpop.f32.mrb[0].mxu0
      %v1033 = vpop.f32.mrb[0].mxu0
      %v1034 = vadd.f32 %v946, %v1033
      %v1035 = vpop.f32.mrb[0].mxu0
      %1036 = vdwg.mxu0
      %vm1037 = vcmask 130048
      %1038 = vst.msk [vmem:[%s432] sm:$0xff] %vm1037, %v1007
      %1039 = vst.msk [vmem:[%s432 + $0x8] sm:$0xff] %vm1037, %v1010
      %1040 = vst.msk [vmem:[%s432 + $0x10] sm:$0xff] %vm1037, %v1015
      %1041 = vst.msk [vmem:[%s432 + $0x18] sm:$0xff] %vm1037, %v1018
      %1042 = vst.msk [vmem:[%s432 + $0x20] sm:$0xff] %vm1037, %v1023
      %1043 = vst.msk [vmem:[%s432 + $0x28] sm:$0xff] %vm1037, %v1026
      %1044 = vst.msk [vmem:[%s432 + $0x30] sm:$0xff] %vm1037, %v1031
      %1045 = vst.msk [vmem:[%s432 + $0x38] sm:$0xff] %vm1037, %v1034
      %s1046 = smul.u32 8, %s22
      %p1047 = scmp.lt.s32.totalorder %s1046, 15
      %s1048 = scalar_select %p1047, %s1046, 15
      %s1049 = smul.addr %s1048, 8
      %s1050 = scalar_lea.vmem %s11, %s1049
      // Predicated region
      $region65: #{tpu_custom_call.1} parent=63 // pred_check
        %p1051 = pneg %p286
      $region66: #{tpu_custom_call.1} parent=63 // pred_check_branch
        %1053 = sbr.rel (%p1051) target = $region68
      $region67: #{tpu_custom_call.1} parent=63 // pred_region
        %s1054 = smul.u32 8, %s22
      $region68: #{tpu_custom_call.1} parent=63 // pred_fallthru
        _
    $region64: #{tpu_custom_call.1} parent=5 // pred_fallthru
      _
    %p1055 = scmp.le.s32.totalorder 2, %s17
    // Predicated region
    $region69: #{tpu_custom_call.1} parent=5 // pred_check
      %p1056 = pneg %p1055
    $region70: #{tpu_custom_call.1} parent=5 // pred_check_branch
      %1058 = sbr.rel (%p1056) target = $region72
    $region71: #{tpu_custom_call.1} parent=5 // pred_region
      %s1059 = ssub.s32 %s17, 2
      // Predicated region
      $region73: #{tpu_custom_call.1} parent=71 // pred_check
        %p1060 = pneg %p292
      $region74: #{tpu_custom_call.1} parent=71 // pred_check_branch
        %1062 = sbr.rel (%p1060) target = $region76
      $region75: #{tpu_custom_call.1} parent=71 // pred_region
        %s1063 = smul.u32 8, %s23
        %p1064 = scmp.lt.s32.totalorder %s1063, 15
        %s1065 = scalar_select %p1064, %s1063, 15
        %s1066 = smul.addr %s1065, 8
        %s1067 = scalar_lea.vmem %s11, %s1066
      $region76: #{tpu_custom_call.1} parent=71 // pred_fallthru
        _
    $region72: #{tpu_custom_call.1} parent=5 // pred_fallthru
      _
  $region6: #{tpu_custom_call.1} parent=0 // loop_footer
    %s21 = sadd.s32 1, %s17
  $region7: #{tpu_custom_call.1} parent=0 // loop_footer_branch
    %16 = sbr.rel target = $region3
  $region8: #{tpu_custom_call.1} parent=0 // loop_exit
    _

</llo_original>
